<compile_context>
chip_gen: v7x
topology: tpu7x:2x2x1
jax: 0.10.0
libtpu: 0.0.40
codegen_flags: <defaults>
</compile_context>

<pallas_src>
import jax
import jax.numpy as jnp
from jax.experimental import pallas as pl
from jax.experimental.pallas import tpu as pltpu

_EPS = 1e-5
_SLOPE = 0.2
# Tap offsets (dh, dw) in raster order t = kh*3 + kw, matching the (kh, kw, cin)
# flattening of the weights and the patch rows.
_TAPS = tuple((kh - 1, kw - 1) for kh in range(3) for kw in range(3))


def _make_fused_kernel(N, C, H, W):
    HW = H * W
    NHW = N * HW

    def kernel(z_ref, w_ref, mask_ref, out_ref):
        # z_ref:    (C, N*HW)    input images (channel-major, batch folded in lanes)
        # w_ref:    (C, 9*C)     this layer's weight, laid out (cout, kh*kw*cin)
        # mask_ref: (9*C, N*HW)  zero-padding masks, rows aligned with patch rows
        # out_ref:  (C, N*HW)    Z, resident in VMEM across the layer grid axis
        layer = pl.program_id(0)

        @pl.when(layer == 0)
        def _init():
            out_ref[...] = z_ref[...]

        z = out_ref[...].astype(jnp.float32)            # current Z, (C, N*HW)
        w = w_ref[...].astype(jnp.float32)              # (Cout, 9*Cin)

        # 9 lane shifts (XLU), shared across the whole batch, built in registers.
        pieces = []
        for (dh, dw) in _TAPS:
            off = dh * W + dw                           # source pixel = p + off
            if off == 0:
                pieces.append(z)
            else:
                pieces.append(pltpu.roll(z, shift=(-off) % NHW, axis=1))
        # One concatenate + ONE full-tile mask multiply (mask row t*C+c == tap t).
        # The mask zeroes all out-of-image taps, which also covers wrap-around
        # between images on the folded lane axis  ==  zero padding.
        patch = jnp.concatenate(pieces, axis=0) * mask_ref[...]   # (9*C, N*HW)

        # 3x3 conv for the whole batch as ONE im2col matmul, f32 accumulate.
        # (Default Mosaic f32 matmul = multi-pass bf16 emulation, ~f32 accurate.)
        dz = jax.lax.dot_general(
            w, patch,
            dimension_numbers=(((1,), (0,)), ((), ())),
            preferred_element_type=jnp.float32,
        )                                               # (Cout, N*HW)

        # Instance norm: stats per (n, c) over that image's HW lane segment
        # (biased variance, eps inside rsqrt -> matches F.instance_norm).
        segs = []
        for n in range(N):                              # N is a small static const
            seg = dz[:, n * HW:(n + 1) * HW]
            mean = jnp.mean(seg, axis=1, keepdims=True)
            cent = seg - mean
            var = jnp.mean(cent * cent, axis=1, keepdims=True)
            segs.append(cent * jax.lax.rsqrt(var + _EPS))
        dzn = jnp.concatenate(segs, axis=1)             # (Cout, N*HW)

        # Leaky ReLU (negative_slope=0.2) and residual update of resident Z.
        dzn = jnp.where(dzn >= 0, dzn, _SLOPE * dzn)
        out_ref[...] = (z + dzn).astype(out_ref.dtype)

    return kernel


def _patch_masks(N, C, H, W, dtype):
    """(9*C, N*HW) masks; row t*C + c is 1 iff tap t's source pixel is in-image."""
    HW = H * W
    hw = jnp.arange(HW, dtype=jnp.int32)
    row, col = hw // W, hw % W
    taps = []
    for dh, dw in _TAPS:
        valid = ((row + dh >= 0) & (row + dh < H) &
                 (col + dw >= 0) & (col + dw < W))
        taps.append(valid)
    m = jnp.stack(taps, axis=0).astype(dtype)           # (9, HW)
    m = jnp.tile(m, (1, N))                             # (9, N*HW)  per-image tile
    return jnp.repeat(m, C, axis=0)                     # (9*C, N*HW)


def resnet_fo_forward(z_nchw, K):
    """Full resNetFO.forward (embed_proj=False).

    z_nchw: (N, C, H, W) input (PyTorch layout).
    K:      (num_layers, Cout, Cin, 3, 3) conv weights.
    Returns (Z, Z) in NCHW, matching the PyTorch module.
    """
    N, C, H, W = z_nchw.shape
    L = K.shape[0]
    HW = H * W
    NHW = N * HW

    # Lane-dense, batch-folded layout: (C, N*HW) (tiny host-side transpose).
    z2d = jnp.transpose(z_nchw, (1, 0, 2, 3)).reshape(C, NHW)
    # Hoisted weight transform: (L, Cout, Cin, 3, 3) -> (L, Cout, 9*Cin), 9*Cin
    # axis ordered (kh, kw, cin) to match the im2col patch rows.
    w_all = jnp.transpose(K, (0, 1, 3, 4, 2)).reshape(L, C, 9 * C)
    masks = _patch_masks(N, C, H, W, jnp.float32)       # (9*C, N*HW)

    conv_flops = 2 * N * L * HW * (9 * C) * C
    elt_flops = 8 * N * L * C * HW                      # norm + lrelu + residual
    io_bytes = (2 * N * C * HW + L * C * 9 * C + 9 * C * NHW) * 4

    out = pl.pallas_call(
        _make_fused_kernel(N, C, H, W),
        out_shape=jax.ShapeDtypeStruct((C, NHW), z_nchw.dtype),
        grid=(L,),
        in_specs=[
            pl.BlockSpec((C, NHW), lambda l: (0, 0)),             # Z (whole batch)
            pl.BlockSpec((None, C, 9 * C), lambda l: (l, 0, 0)),  # K, per layer
            pl.BlockSpec((9 * C, NHW), lambda l: (0, 0)),         # masks, resident
        ],
        out_specs=pl.BlockSpec((C, NHW), lambda l: (0, 0)),
        input_output_aliases={0: 0},                    # reuse Z's HBM buffer
        compiler_params=pltpu.CompilerParams(
            dimension_semantics=("arbitrary",)),
        cost_estimate=pl.CostEstimate(
            flops=conv_flops + elt_flops,
            transcendentals=N * L * C,
            bytes_accessed=io_bytes),
    )(z2d, w_all, masks)

    z_out = jnp.transpose(out.reshape(C, N, H, W), (1, 0, 2, 3))
    return z_out, z_out


def _reference_forward(z, K):
    """Pure-XLA reference with the exact module semantics (numeric check)."""
    for i in range(K.shape[0]):
        dz = jax.lax.conv_general_dilated(
            z, K[i], window_strides=(1, 1), padding=((1, 1), (1, 1)),
            dimension_numbers=("NCHW", "OIHW", "NCHW"),
            precision=jax.lax.Precision.HIGHEST)
        mean = dz.mean(axis=(2, 3), keepdims=True)
        var = ((dz - mean) ** 2).mean(axis=(2, 3), keepdims=True)
        dz = (dz - mean) * jax.lax.rsqrt(var + _EPS)
        dz = jnp.where(dz >= 0, dz, _SLOPE * dz)
        z = z + dz
    return z


def init_params(key, num_layers, nopen):
    """Deterministic xavier-uniform-style init for K (and K2, unused here)."""
    fan = nopen * 3 * 3
    bound = (6.0 / (fan + fan)) ** 0.5
    k1, k2 = jax.random.split(key)
    K = jax.random.uniform(k1, (num_layers, nopen, nopen, 3, 3),
                           minval=-bound, maxval=bound, dtype=jnp.float32)
    # K2 exists as a parameter in the module but is unused when embed_proj=False.
    K2 = jax.random.uniform(k2, (num_layers, nopen, nopen, 3, 3),
                            minval=-bound, maxval=bound, dtype=jnp.float32)
    return K, K2


if __name__ == "__main__":
    # Small shapes consistent with the module: batch=2, nopen=4, 16x16 spatial.
    num_layers = 3
    nopen = 4
    N, H, W = 2, 16, 16

    key = jax.random.PRNGKey(0)
    kx, kp = jax.random.split(key)
    x = jax.random.normal(kx, (N, nopen, H, W), dtype=jnp.float32)   # NCHW input
    K, K2 = init_params(kp, num_layers, nopen)

    z_out, z_out2 = jax.jit(resnet_fo_forward)(x, K)
    jax.block_until_ready(z_out)
    jax.block_until_ready(z_out2)

    assert z_out.shape == (N, nopen, H, W)
    assert bool(jnp.all(jnp.isfinite(z_out)))

    # Numerical check against a pure-XLA reference of the same forward pass.
    z_ref = _reference_forward(x, K)
    max_err = float(jnp.max(jnp.abs(z_out - z_ref)))
    assert max_err < 2e-3, f"kernel/reference mismatch: max|err|={max_err}"

    print("KERNEL_OK")
</pallas_src>

<mosaic_0001>
module attributes {stable_mosaic.version = 11 : i64} {
  func.func @kernel(%arg0: i32, %arg1: memref<4x512xf32, #tpu.memory_space<vmem>>, %arg2: memref<1x4x36xf32, #tpu.memory_space<vmem>>, %arg3: memref<36x512xf32, #tpu.memory_space<vmem>>, %arg4: memref<4x512xf32, #tpu.memory_space<vmem>>) attributes {dimension_semantics = [#tpu.dimension_semantics<arbitrary>], iteration_bounds = array<i64: 3>, scalar_prefetch = 0 : i64, scratch_operands = 0 : i64, tpu.core_type = #tpu.core_type<tc>, window_params = [{pipeline_mode = #tpu.pipeline_mode<synchronous>, transform_indices = @transform_0, window_bounds = array<i64: 4, 512>}, {transform_indices = @transform_1, window_bounds = array<i64: 1, 4, 36>}, {pipeline_mode = #tpu.pipeline_mode<synchronous>, transform_indices = @transform_2, window_bounds = array<i64: 36, 512>}, {pipeline_mode = #tpu.pipeline_mode<synchronous>, transform_indices = @transform_3, window_bounds = array<i64: 4, 512>}]} {
    %c0_i32 = arith.constant 0 : i32
    %0 = arith.cmpi eq, %arg0, %c0_i32 : i32
    %1 = arith.extui %0 : i1 to i32
    %c0_i32_0 = arith.constant 0 : i32
    %2 = arith.cmpi ne, %1, %c0_i32_0 : i32
    scf.if %2 {
      %c0_21 = arith.constant 0 : index
      %c0_22 = arith.constant 0 : index
      %60 = vector.load %arg1[%c0_21, %c0_22] : memref<4x512xf32, #tpu.memory_space<vmem>>, vector<4x512xf32>
      %c0_23 = arith.constant 0 : index
      %c0_24 = arith.constant 0 : index
      %61 = vector.load %arg4[%c0_23, %c0_24] : memref<4x512xf32, #tpu.memory_space<vmem>>, vector<4x512xf32>
      tpu.vector_store %arg4[%c0_23, %c0_24], %60 {strides = array<i32>} : memref<4x512xf32, #tpu.memory_space<vmem>>, vector<4x512xf32>,
    } else {
    }
    %c0 = arith.constant 0 : index
    %c0_1 = arith.constant 0 : index
    %3 = vector.load %arg4[%c0, %c0_1] : memref<4x512xf32, #tpu.memory_space<vmem>>, vector<4x512xf32>
    %c0_2 = arith.constant 0 : index
    %c0_3 = arith.constant 0 : index
    %c0_4 = arith.constant 0 : index
    %4 = vector.load %arg2[%c0_2, %c0_3, %c0_4] : memref<1x4x36xf32, #tpu.memory_space<vmem>>, vector<1x4x36xf32>
    %5 = vector.shape_cast %4 : vector<1x4x36xf32> to vector<4x36xf32>
    %c17_i32 = arith.constant 17 : i32
    %6 = tpu.dynamic_rotate %3 by %c17_i32 dim 1 : vector<4x512xf32>, i32 -> vector<4x512xf32>
    %c16_i32 = arith.constant 16 : i32
    %7 = tpu.dynamic_rotate %3 by %c16_i32 dim 1 : vector<4x512xf32>, i32 -> vector<4x512xf32>
    %c15_i32 = arith.constant 15 : i32
    %8 = tpu.dynamic_rotate %3 by %c15_i32 dim 1 : vector<4x512xf32>, i32 -> vector<4x512xf32>
    %c1_i32 = arith.constant 1 : i32
    %9 = tpu.dynamic_rotate %3 by %c1_i32 dim 1 : vector<4x512xf32>, i32 -> vector<4x512xf32>
    %c511_i32 = arith.constant 511 : i32
    %10 = tpu.dynamic_rotate %3 by %c511_i32 dim 1 : vector<4x512xf32>, i32 -> vector<4x512xf32>
    %c497_i32 = arith.constant 497 : i32
    %11 = tpu.dynamic_rotate %3 by %c497_i32 dim 1 : vector<4x512xf32>, i32 -> vector<4x512xf32>
    %c496_i32 = arith.constant 496 : i32
    %12 = tpu.dynamic_rotate %3 by %c496_i32 dim 1 : vector<4x512xf32>, i32 -> vector<4x512xf32>
    %c495_i32 = arith.constant 495 : i32
    %13 = tpu.dynamic_rotate %3 by %c495_i32 dim 1 : vector<4x512xf32>, i32 -> vector<4x512xf32>
    %14 = tpu.concatenate %6, %7, %8, %9, %3, %10, %11, %12, %13 in 0 : vector<4x512xf32>, vector<4x512xf32>, vector<4x512xf32>, vector<4x512xf32>, vector<4x512xf32>, vector<4x512xf32>, vector<4x512xf32>, vector<4x512xf32>, vector<4x512xf32> -> vector<36x512xf32>
    %c0_5 = arith.constant 0 : index
    %c0_6 = arith.constant 0 : index
    %15 = vector.load %arg3[%c0_5, %c0_6] : memref<36x512xf32, #tpu.memory_space<vmem>>, vector<36x512xf32>
    %16 = arith.mulf %14, %15 : vector<36x512xf32>
    %cst = arith.constant dense<0.000000e+00> : vector<4x512xf32>
    %17 = tpu.matmul %5, %16, %cst {dimension_numbers = #tpu.dot_dimension_numbers<[1], [0], [0], [1], [0, 0, 1, 1], [], []>} : vector<4x36xf32>, vector<36x512xf32>, vector<4x512xf32> -> vector<4x512xf32>
    %18 = vector.extract_strided_slice %17 {offsets = [0, 0], sizes = [4, 256], strides = [1, 1]} : vector<4x512xf32> to vector<4x256xf32>
    %cst_7 = arith.constant dense<0.000000e+00> : vector<4xf32>
    %19 = vector.multi_reduction <add>, %18, %cst_7 [1] : vector<4x256xf32> to vector<4xf32>
    %20 = vector.shape_cast %19 : vector<4xf32> to vector<4x1xf32>
    %cst_8 = arith.constant 2.560000e+02 : f32
    %21 = vector.broadcast %cst_8 : f32 to vector<4x1xf32>
    %22 = arith.divf %20, %21 : vector<4x1xf32>
    %23 = vector.broadcast %22 : vector<4x1xf32> to vector<4x256xf32>
    %24 = arith.subf %18, %23 : vector<4x256xf32>
    %25 = arith.mulf %24, %24 : vector<4x256xf32>
    %cst_9 = arith.constant dense<0.000000e+00> : vector<4xf32>
    %26 = vector.multi_reduction <add>, %25, %cst_9 [1] : vector<4x256xf32> to vector<4xf32>
    %27 = vector.shape_cast %26 : vector<4xf32> to vector<4x1xf32>
    %cst_10 = arith.constant 2.560000e+02 : f32
    %28 = vector.broadcast %cst_10 : f32 to vector<4x1xf32>
    %29 = arith.divf %27, %28 : vector<4x1xf32>
    %cst_11 = arith.constant 9.99999974E-6 : f32
    %30 = vector.broadcast %cst_11 : f32 to vector<4x1xf32>
    %31 = arith.addf %29, %30 : vector<4x1xf32>
    %32 = math.rsqrt %31 : vector<4x1xf32>
    %33 = vector.broadcast %32 : vector<4x1xf32> to vector<4x256xf32>
    %34 = arith.mulf %24, %33 : vector<4x256xf32>
    %35 = vector.extract_strided_slice %17 {offsets = [0, 256], sizes = [4, 256], strides = [1, 1]} : vector<4x512xf32> to vector<4x256xf32>
    %cst_12 = arith.constant dense<0.000000e+00> : vector<4xf32>
    %36 = vector.multi_reduction <add>, %35, %cst_12 [1] : vector<4x256xf32> to vector<4xf32>
    %37 = vector.shape_cast %36 : vector<4xf32> to vector<4x1xf32>
    %cst_13 = arith.constant 2.560000e+02 : f32
    %38 = vector.broadcast %cst_13 : f32 to vector<4x1xf32>
    %39 = arith.divf %37, %38 : vector<4x1xf32>
    %40 = vector.broadcast %39 : vector<4x1xf32> to vector<4x256xf32>
    %41 = arith.subf %35, %40 : vector<4x256xf32>
    %42 = arith.mulf %41, %41 : vector<4x256xf32>
    %cst_14 = arith.constant dense<0.000000e+00> : vector<4xf32>
    %43 = vector.multi_reduction <add>, %42, %cst_14 [1] : vector<4x256xf32> to vector<4xf32>
    %44 = vector.shape_cast %43 : vector<4xf32> to vector<4x1xf32>
    %cst_15 = arith.constant 2.560000e+02 : f32
    %45 = vector.broadcast %cst_15 : f32 to vector<4x1xf32>
    %46 = arith.divf %44, %45 : vector<4x1xf32>
    %cst_16 = arith.constant 9.99999974E-6 : f32
    %47 = vector.broadcast %cst_16 : f32 to vector<4x1xf32>
    %48 = arith.addf %46, %47 : vector<4x1xf32>
    %49 = math.rsqrt %48 : vector<4x1xf32>
    %50 = vector.broadcast %49 : vector<4x1xf32> to vector<4x256xf32>
    %51 = arith.mulf %41, %50 : vector<4x256xf32>
    %52 = tpu.concatenate %34, %51 in 1 : vector<4x256xf32>, vector<4x256xf32> -> vector<4x512xf32>
    %cst_17 = arith.constant 0.000000e+00 : f32
    %53 = vector.broadcast %cst_17 : f32 to vector<4x512xf32>
    %54 = arith.cmpf oge, %52, %53 : vector<4x512xf32>
    %cst_18 = arith.constant 2.000000e-01 : f32
    %55 = vector.broadcast %cst_18 : f32 to vector<4x512xf32>
    %56 = arith.mulf %55, %52 : vector<4x512xf32>
    %57 = arith.select %54, %52, %56 : vector<4x512xi1>, vector<4x512xf32>
    %58 = arith.addf %3, %57 : vector<4x512xf32>
    %c0_19 = arith.constant 0 : index
    %c0_20 = arith.constant 0 : index
    %59 = vector.load %arg4[%c0_19, %c0_20] : memref<4x512xf32, #tpu.memory_space<vmem>>, vector<4x512xf32>
    tpu.vector_store %arg4[%c0_19, %c0_20], %58 {strides = array<i32>} : memref<4x512xf32, #tpu.memory_space<vmem>>, vector<4x512xf32>,
    return
  }
  func.func @transform_0(%arg0: i32) -> (i32, i32) {
    %c0_i32 = arith.constant 0 : i32
    %c0_i32_0 = arith.constant 0 : i32
    %c0_i32_1 = arith.constant 0 : i32
    return %c0_i32, %c0_i32_0 : i32, i32
  }
  func.func @transform_1(%arg0: i32) -> (i32, i32, i32) {
    %c0_i32 = arith.constant 0 : i32
    %c0_i32_0 = arith.constant 0 : i32
    %c0_i32_1 = arith.constant 0 : i32
    return %arg0, %c0_i32, %c0_i32_0 : i32, i32, i32
  }
  func.func @transform_2(%arg0: i32) -> (i32, i32) {
    %c0_i32 = arith.constant 0 : i32
    %c0_i32_0 = arith.constant 0 : i32
    %c0_i32_1 = arith.constant 0 : i32
    return %c0_i32, %c0_i32_0 : i32, i32
  }
  func.func @transform_3(%arg0: i32) -> (i32, i32) {
    %c0_i32 = arith.constant 0 : i32
    %c0_i32_0 = arith.constant 0 : i32
    %c0_i32_1 = arith.constant 0 : i32
    return %c0_i32, %c0_i32_0 : i32, i32
  }
}

</mosaic_0001>

<llo_original>
// kernel: resnet_fo_forward.1
$region0: #{resnet_fo_forward.1}
  #allocation0 [shape = 'u32[]', space=smem, size = 0x4, offset = 0x4, fixed_abs, tag = 'smem constant byte address 0x4 - core index']
  #allocation1 [shape = 'u32[144,128]{1,0:T(1,128)}', space=vmem, size = 0x12000, scoped, tag = 'internal scratch']
  %s0 = inlined_call_operand.vmem [shape: f32[4,512], index: 0, kind: input, shape index: {}, may-alias: {0,3}]
  %s1 = inlined_call_operand.vmem [shape: f32[3,4,36], index: 1, kind: input, shape index: {}]
  %s2 = inlined_call_operand.vmem [shape: f32[36,512], index: 2, kind: input, shape index: {}]
  %s3 = inlined_call_operand.vmem [shape: f32[4,512], index: 3, kind: output, shape index: {}, may-alias: {0,3}]
  %s4 = sld [smem:[#allocation0]]
  $region49: #{resnet_fo_forward.1} parent=0
    _
  %s6 = ssub.s32 1, %s4
  %s7 = scalar_select 0, %s6, %s4
  loop: start=0, step=1, limit=5
  $region2: #{resnet_fo_forward.1} parent=0 // loop_pre_header
    _
  $region3: #{resnet_fo_forward.1} parent=0 // loop_header
    %s9 = sphi 0, %s13
    %p10 = scmp.ge.s32.totalorder %s9, 5
    %s17 = sphi 0, %s17
    %s19 = sphi 0, %s17
    %s20 = sphi 0, %s19
    %s34 = sphi 0, %s20
    %s40 = sphi 0, %s42
    %s43 = sphi 0, %s40
    %s44 = sphi 0, %s43
    %s60 = sphi 0, %s44
    %s64 = sphi 0, %s64
    %s66 = sphi 0, %s64
    %s67 = sphi 0, %s66
    %s81 = sphi 0, %s67
    %s85 = sphi 0, %s85
    %s87 = sphi 0, %s85
    %s88 = sphi 0, %s87
    %s102 = sphi 0, %s88
  $region4: #{resnet_fo_forward.1} parent=0 // loop_header_branch
    %12 = sbr.rel (%p10) target = $region8
  $region5: #{resnet_fo_forward.1} parent=0 // loop_body
    %s14 = ssub.s32 %s9, 1
    %s15 = ssub.s32 %s9, 2
    %s16 = sadd.s32 %s9, 1
    %s18 = sadd.s32 %s17, 1
    %p21 = scmp.eq.s32.totalorder %s9, 2
    %p22 = scmp.ne.s32.totalorder %s17, %s19
    %p23 = scmp.eq.s32.totalorder %s9, 0
    %p24 = por %p22, %p23
    %p25 = scmp.ne.s32.totalorder %s17, %s19
    %p26 = scmp.eq.s32.totalorder %s14, 2
    %p27 = por %p25, %p26
    %p28 = scmp.ne.s32.totalorder %s19, %s20
    %p29 = scmp.eq.s32.totalorder %s14, 0
    %p30 = por %p28, %p29
    %p31 = scmp.ne.s32.totalorder %s19, %s20
    %p32 = scmp.eq.s32.totalorder %s15, 2
    %p33 = por %p31, %p32
    %p35 = scmp.ne.s32.totalorder %s20, %s34
    %p36 = scmp.eq.s32.totalorder %s15, 0
    %p37 = por %p35, %p36
    %s38 = ssub.s32 %s9, %s16
    %p39 = scmp.eq.s32.totalorder %s38, 0
    %s41 = sadd.s32 %s40, 1
    %s42 = scalar_select %p39, %s40, %s41
    %p45 = pneg %p39
    %p46 = scmp.eq.s32.totalorder %s9, 2
    %p47 = por %p45, %p46
    %p48 = scmp.ne.s32.totalorder %s40, %s43
    %p49 = scmp.eq.s32.totalorder %s9, 0
    %p50 = por %p48, %p49
    %p51 = scmp.ne.s32.totalorder %s40, %s43
    %p52 = scmp.eq.s32.totalorder %s14, 2
    %p53 = por %p51, %p52
    %p54 = scmp.ne.s32.totalorder %s43, %s44
    %p55 = scmp.eq.s32.totalorder %s14, 0
    %p56 = por %p54, %p55
    %p57 = scmp.ne.s32.totalorder %s43, %s44
    %p58 = scmp.eq.s32.totalorder %s15, 2
    %p59 = por %p57, %p58
    %p61 = scmp.ne.s32.totalorder %s44, %s60
    %p62 = scmp.eq.s32.totalorder %s15, 0
    %p63 = por %p61, %p62
    %s65 = sadd.s32 %s64, 1
    %p68 = scmp.eq.s32.totalorder %s9, 2
    %p69 = scmp.ne.s32.totalorder %s64, %s66
    %p70 = scmp.eq.s32.totalorder %s9, 0
    %p71 = por %p69, %p70
    %p72 = scmp.ne.s32.totalorder %s64, %s66
    %p73 = scmp.eq.s32.totalorder %s14, 2
    %p74 = por %p72, %p73
    %p75 = scmp.ne.s32.totalorder %s66, %s67
    %p76 = scmp.eq.s32.totalorder %s14, 0
    %p77 = por %p75, %p76
    %p78 = scmp.ne.s32.totalorder %s66, %s67
    %p79 = scmp.eq.s32.totalorder %s15, 2
    %p80 = por %p78, %p79
    %p82 = scmp.ne.s32.totalorder %s67, %s81
    %p83 = scmp.eq.s32.totalorder %s15, 0
    %p84 = por %p82, %p83
    %s86 = sadd.s32 %s85, 1
    %p89 = scmp.eq.s32.totalorder %s9, 2
    %p90 = scmp.ne.s32.totalorder %s85, %s87
    %p91 = scmp.eq.s32.totalorder %s9, 0
    %p92 = por %p90, %p91
    %p93 = scmp.ne.s32.totalorder %s85, %s87
    %p94 = scmp.eq.s32.totalorder %s14, 2
    %p95 = por %p93, %p94
    %p96 = scmp.ne.s32.totalorder %s87, %s88
    %p97 = scmp.eq.s32.totalorder %s14, 0
    %p98 = por %p96, %p97
    %p99 = scmp.ne.s32.totalorder %s87, %s88
    %p100 = scmp.eq.s32.totalorder %s15, 2
    %p101 = por %p99, %p100
    %p103 = scmp.ne.s32.totalorder %s88, %s102
    %p104 = scmp.eq.s32.totalorder %s15, 0
    %p105 = por %p103, %p104
    %p106 = scmp.le.s32.totalorder 1, %s9
    %p107 = scmp.lt.s32.totalorder %s9, 4
    %p108 = pnand %p106, %p107
    %p109 = pneg %p108
    // Predicated region
    $region9: #{resnet_fo_forward.1} parent=5 // pred_check
      _
    $region10: #{resnet_fo_forward.1} parent=5 // pred_check_branch
      %111 = sbr.rel (%p108) target = $region12
    $region11: #{resnet_fo_forward.1} parent=5 // pred_region
      %s112 = ssub.s32 %s9, 1
      // Predicated region
      $region13: #{resnet_fo_forward.1} parent=11 // pred_check
        %p113 = pneg %p30
      $region14: #{resnet_fo_forward.1} parent=11 // pred_check_branch
        %115 = sbr.rel (%p113) target = $region16
      $region15: #{resnet_fo_forward.1} parent=11 // pred_region
        _
      $region16: #{resnet_fo_forward.1} parent=11 // pred_fallthru
        _
      // Predicated region
      $region17: #{resnet_fo_forward.1} parent=11 // pred_check
        %p116 = pneg %p77
      $region18: #{resnet_fo_forward.1} parent=11 // pred_check_branch
        %118 = sbr.rel (%p116) target = $region20
      $region19: #{resnet_fo_forward.1} parent=11 // pred_region
        _
      $region20: #{resnet_fo_forward.1} parent=11 // pred_fallthru
        _
    $region12: #{resnet_fo_forward.1} parent=5 // pred_fallthru
      _
    %p119 = scmp.lt.s32.totalorder %s9, 3
    // Predicated region
    $region21: #{resnet_fo_forward.1} parent=5 // pred_check
      %p120 = pneg %p119
    $region22: #{resnet_fo_forward.1} parent=5 // pred_check_branch
      %122 = sbr.rel (%p120) target = $region24
    $region23: #{resnet_fo_forward.1} parent=5 // pred_region
      // Predicated region
      $region25: #{resnet_fo_forward.1} parent=23 // pred_check
        %p123 = pneg %p50
      $region26: #{resnet_fo_forward.1} parent=23 // pred_check_branch
        %125 = sbr.rel (%p123) target = $region28
      $region27: #{resnet_fo_forward.1} parent=23 // pred_region
        %p126 = scmp.lt.s32.totalorder %s9, 2
        %s127 = scalar_select %p126, %s9, 2
        %s128 = smul.addr %s127, 4
        %s129 = scalar_lea.vmem %s1, %s128
      $region28: #{resnet_fo_forward.1} parent=23 // pred_fallthru
        _
    $region24: #{resnet_fo_forward.1} parent=5 // pred_fallthru
      _
    %p130 = scmp.le.s32.totalorder 1, %s9
    %p131 = scmp.lt.s32.totalorder %s9, 4
    %p132 = pnand %p130, %p131
    %p133 = pneg %p132
    // Predicated region
    $region29: #{resnet_fo_forward.1} parent=5 // pred_check
      _
    $region30: #{resnet_fo_forward.1} parent=5 // pred_check_branch
      %135 = sbr.rel (%p132) target = $region32
    $region31: #{resnet_fo_forward.1} parent=5 // pred_region
      %s136 = ssub.s32 %s9, 1
      %p137 = pneg %p30
      %p138 = pneg %p27
      %p139 = scmp.lt.s32.totalorder %s14, 2
      %s140 = scalar_select %p139, %s14, 2
      %s141 = smul.addr %s140, 4
      %s142 = scalar_lea.vmem %s1, %s141
      %p143 = pneg %p56
      %p144 = pneg %p53
      %p145 = pneg %p77
      %p146 = pneg %p74
      %p147 = pneg %p98
      %p148 = pneg %p95
      %p149 = scmp.lt.s32.totalorder %s14, 2
      %s150 = scalar_select %p149, %s14, 2
      %s151 = smul.addr %s150, 4
      %s152 = scalar_lea.vmem %s1, %s151
      %p153 = scmp.eq.s32.totalorder %s14, 0
      // Predicated region
      $region33: #{resnet_fo_forward.1} parent=31 // pred_check
        %p154 = pneg %p153
      $region34: #{resnet_fo_forward.1} parent=31 // pred_check_branch
        %156 = sbr.rel (%p154) target = $region36
      $region35: #{resnet_fo_forward.1} parent=31 // pred_region
        %v157 = vld [vmem:[%s0] sm:$0xff]
        %v158 = vld [vmem:[%s0 + $0x8] sm:$0xff]
        %159 = vst [vmem:[%s3] sm:$0xff] %v157
        %160 = vst [vmem:[%s3 + $0x8] sm:$0xff] %v158
      $region36: #{resnet_fo_forward.1} parent=31 // pred_fallthru
        _
      %v161 = vld [vmem:[%s3] sm:$0xff]
      %v162 = vld [vmem:[%s3 + $0x8] sm:$0xff]
      %v163 = vld [vmem:[%s152] sm:$0xf]
      %v166 = vcombine.high %v161, %v161
      %v167 = vcombine.high %v162, %v162
      %170 = vrot.lane.b32.xlu0 %v161, 17
      %v171 = vpop.permute.xlu0 %170
      %172 = vrot.lane.b32.xlu0 %v166, 17
      %v173 = vpop.permute.xlu0 %172
      %174 = vrot.lane.b32.xlu0 %v162, 17
      %v175 = vpop.permute.xlu0 %174
      %176 = vrot.lane.b32.xlu0 %v167, 17
      %v177 = vpop.permute.xlu0 %176
      %v178 = vlaneseq
      %v179 = vand.u32 %v178, 127
      %vm180 = vcmp.lt.s32.totalorder %v179, 17
      %v181 = vsel %vm180, %v175, %v177
      %v182 = vsel %vm180, %v173, %v175
      %v183 = vsel %vm180, %v171, %v173
      %v184 = vsel %vm180, %v177, %v171
      %185 = vrot.lane.b32.xlu0 %v161, 16
      %v186 = vpop.permute.xlu0 %185
      %187 = vrot.lane.b32.xlu0 %v166, 16
      %v188 = vpop.permute.xlu0 %187
      %189 = vrot.lane.b32.xlu0 %v162, 16
      %v190 = vpop.permute.xlu0 %189
      %191 = vrot.lane.b32.xlu0 %v167, 16
      %v192 = vpop.permute.xlu0 %191
      %vm193 = vcmp.lt.s32.totalorder %v179, 16
      %v194 = vsel %vm193, %v190, %v192
      %v195 = vsel %vm193, %v188, %v190
      %v196 = vsel %vm193, %v186, %v188
      %v197 = vsel %vm193, %v192, %v186
      %198 = vrot.lane.b32.xlu0 %v161, 15
      %v199 = vpop.permute.xlu0 %198
      %200 = vrot.lane.b32.xlu0 %v166, 15
      %v201 = vpop.permute.xlu0 %200
      %202 = vrot.lane.b32.xlu0 %v162, 15
      %v203 = vpop.permute.xlu0 %202
      %204 = vrot.lane.b32.xlu0 %v167, 15
      %v205 = vpop.permute.xlu0 %204
      %vm206 = vcmp.lt.s32.totalorder %v179, 15
      %v207 = vsel %vm206, %v203, %v205
      %v208 = vsel %vm206, %v201, %v203
      %v209 = vsel %vm206, %v199, %v201
      %v210 = vsel %vm206, %v205, %v199
      %211 = vrot.lane.b32.xlu0 %v161, 1
      %v212 = vpop.permute.xlu0 %211
      %213 = vrot.lane.b32.xlu0 %v166, 1
      %v214 = vpop.permute.xlu0 %213
      %215 = vrot.lane.b32.xlu0 %v162, 1
      %v216 = vpop.permute.xlu0 %215
      %217 = vrot.lane.b32.xlu0 %v167, 1
      %v218 = vpop.permute.xlu0 %217
      %vm219 = vcmp.lt.s32.totalorder %v179, 1
      %v220 = vsel %vm219, %v216, %v218
      %v221 = vsel %vm219, %v214, %v216
      %v222 = vsel %vm219, %v212, %v214
      %v223 = vsel %vm219, %v218, %v212
      %224 = vrot.lane.b32.xlu0 %v161, 127
      %v225 = vpop.permute.xlu0 %224
      %226 = vrot.lane.b32.xlu0 %v166, 127
      %v227 = vpop.permute.xlu0 %226
      %228 = vrot.lane.b32.xlu0 %v162, 127
      %v229 = vpop.permute.xlu0 %228
      %230 = vrot.lane.b32.xlu0 %v167, 127
      %v231 = vpop.permute.xlu0 %230
      %vm232 = vcmp.lt.s32.totalorder %v179, 127
      %v233 = vsel %vm232, %v229, %v231
      %v234 = vsel %vm232, %v227, %v229
      %v235 = vsel %vm232, %v225, %v227
      %v236 = vsel %vm232, %v231, %v225
      %237 = vrot.lane.b32.xlu0 %v161, 113
      %v238 = vpop.permute.xlu0 %237
      %239 = vrot.lane.b32.xlu0 %v166, 113
      %v240 = vpop.permute.xlu0 %239
      %241 = vrot.lane.b32.xlu0 %v162, 113
      %v242 = vpop.permute.xlu0 %241
      %243 = vrot.lane.b32.xlu0 %v167, 113
      %v244 = vpop.permute.xlu0 %243
      %vm245 = vcmp.lt.s32.totalorder %v179, 113
      %v246 = vsel %vm245, %v242, %v244
      %v247 = vsel %vm245, %v240, %v242
      %v248 = vsel %vm245, %v238, %v240
      %v249 = vsel %vm245, %v244, %v238
      %250 = vrot.lane.b32.xlu0 %v161, 112
      %v251 = vpop.permute.xlu0 %250
      %252 = vrot.lane.b32.xlu0 %v166, 112
      %v253 = vpop.permute.xlu0 %252
      %254 = vrot.lane.b32.xlu0 %v162, 112
      %v255 = vpop.permute.xlu0 %254
      %256 = vrot.lane.b32.xlu0 %v167, 112
      %v257 = vpop.permute.xlu0 %256
      %vm258 = vcmp.lt.s32.totalorder %v179, 112
      %v259 = vsel %vm258, %v255, %v257
      %v260 = vsel %vm258, %v253, %v255
      %v261 = vsel %vm258, %v251, %v253
      %v262 = vsel %vm258, %v257, %v251
      %263 = vrot.lane.b32.xlu0 %v161, 111
      %v264 = vpop.permute.xlu0 %263
      %265 = vrot.lane.b32.xlu0 %v166, 111
      %v266 = vpop.permute.xlu0 %265
      %267 = vrot.lane.b32.xlu0 %v162, 111
      %v268 = vpop.permute.xlu0 %267
      %269 = vrot.lane.b32.xlu0 %v167, 111
      %v270 = vpop.permute.xlu0 %269
      %vm271 = vcmp.lt.s32.totalorder %v179, 111
      %v272 = vsel %vm271, %v268, %v270
      %v273 = vsel %vm271, %v266, %v268
      %v274 = vsel %vm271, %v264, %v266
      %v275 = vsel %vm271, %v270, %v264
      %v280 = vrot.slane %v197, 4
      %v281 = vrot.slane %v196, 4
      %v282 = vrot.slane %v195, 4
      %v283 = vrot.slane %v194, 4
      %v292 = vrot.slane %v223, 4
      %v293 = vrot.slane %v222, 4
      %v294 = vrot.slane %v221, 4
      %v295 = vrot.slane %v220, 4
      %v304 = vrot.slane %v235, 4
      %v305 = vrot.slane %v234, 4
      %v306 = vrot.slane %v233, 4
      %v307 = vrot.slane %v236, 4
      %v316 = vrot.slane %v261, 4
      %v317 = vrot.slane %v260, 4
      %v318 = vrot.slane %v259, 4
      %v319 = vrot.slane %v262, 4
      %vm324 = vcmask 1043456
      %v325 = vsel %vm324, %v184, %v280
      %v326 = vsel %vm324, %v183, %v281
      %v327 = vsel %vm324, %v182, %v282
      %v328 = vsel %vm324, %v181, %v283
      %v329 = vsel %vm324, %v210, %v292
      %v330 = vsel %vm324, %v209, %v293
      %v331 = vsel %vm324, %v208, %v294
      %v332 = vsel %vm324, %v207, %v295
      %v333 = vsel %vm324, %v161, %v304
      %v334 = vsel %vm324, %v166, %v305
      %v335 = vsel %vm324, %v162, %v306
      %v336 = vsel %vm324, %v167, %v307
      %v337 = vsel %vm324, %v248, %v316
      %v338 = vsel %vm324, %v247, %v317
      %v339 = vsel %vm324, %v246, %v318
      %v340 = vsel %vm324, %v249, %v319
      %v341 = vld [vmem:[%s2] sm:$0xff]
      %v342 = vld [vmem:[%s2 + $0x8] sm:$0xff]
      %v343 = vld [vmem:[%s2 + $0x10] sm:$0xff]
      %v344 = vld [vmem:[%s2 + $0x18] sm:$0xff]
      %v345 = vld [vmem:[%s2 + $0x20] sm:$0xff]
      %v346 = vld [vmem:[%s2 + $0x28] sm:$0xff]
      %v347 = vld [vmem:[%s2 + $0x30] sm:$0xff]
      %v348 = vld [vmem:[%s2 + $0x38] sm:$0xff]
      %v349 = vld [vmem:[%s2 + $0x40] sm:$0xff]
      %v350 = vld [vmem:[%s2 + $0x48] sm:$0xff]
      %v351 = vld [vmem:[%s2 + $0x50] sm:$0xff]
      %v352 = vld [vmem:[%s2 + $0x58] sm:$0xff]
      %v353 = vld [vmem:[%s2 + $0x60] sm:$0xff]
      %v354 = vld [vmem:[%s2 + $0x68] sm:$0xff]
      %v355 = vld [vmem:[%s2 + $0x70] sm:$0xff]
      %v356 = vld [vmem:[%s2 + $0x78] sm:$0xff]
      %v357 = vld [vmem:[%s2 + $0x80] sm:$0xf]
      %v358 = vld [vmem:[%s2 + $0x88] sm:$0xf]
      %v359 = vld [vmem:[%s2 + $0x90] sm:$0xf]
      %v360 = vld [vmem:[%s2 + $0x98] sm:$0xf]
      %v361 = vmul.f32 %v325, %v341
      %v362 = vmul.f32 %v326, %v342
      %v363 = vmul.f32 %v327, %v343
      %v364 = vmul.f32 %v328, %v344
      %v365 = vmul.f32 %v329, %v345
      %v366 = vmul.f32 %v330, %v346
      %v367 = vmul.f32 %v331, %v347
      %v368 = vmul.f32 %v332, %v348
      %v369 = vmul.f32 %v333, %v349
      %v370 = vmul.f32 %v334, %v350
      %v371 = vmul.f32 %v335, %v351
      %v372 = vmul.f32 %v336, %v352
      %v373 = vmul.f32 %v337, %v353
      %v374 = vmul.f32 %v338, %v354
      %v375 = vmul.f32 %v339, %v355
      %v376 = vmul.f32 %v340, %v356
      %v377 = vmul.f32 %v274, %v357
      %v378 = vmul.f32 %v273, %v358
      %v379 = vmul.f32 %v272, %v359
      %v380 = vmul.f32 %v275, %v360
      %vm381 = vcmask 293888
      %v383 = vsel %vm381, %v163, 0
      %v386 = vsel %vm324, %v377, 0
      %v389 = vsel %vm324, %v378, 0
      %v392 = vsel %vm324, %v379, 0
      %v395 = vsel %vm324, %v380, 0
      %397 = vmatprep.subr.mxu0 %v362
      %398 = vmatpush1.msra.mxu0 %v361
      %399 = vmatprep.subr.mxu0 %v366
      %400 = vmatpush1.msra.mxu0 %v365
      %401 = vmatprep.subr.mxu0 %v370
      %402 = vmatpush1.msra.mxu0 %v369
      %403 = vmatprep.subr.mxu0 %v374
      %404 = vmatpush1.msra.mxu0 %v373
      %405 = vmatprep.subr.mxu0 %v389
      %406 = vmatpush1.msra.mxu0 %v386
      %407 = vmatprep.subr.mxu0 0.0
      %408 = vmatpush1.msra.mxu0 0.0
      %409 = vmatprep.subr.mxu0 0.0
      %410 = vmatpush1.msra.mxu0 0.0
      %411 = vmatprep.subr.mxu0 0.0
      %412 = vmatpush1.msra.mxu0 0.0
      %413 = vmatprep.subr.mxu0 0.0
      %414 = vmatpush1.msra.mxu0 0.0
      %415 = vmatprep.subr.mxu0 0.0
      %416 = vmatpush1.msra.mxu0 0.0
      %417 = vmatprep.subr.mxu0 0.0
      %418 = vmatpush1.msra.mxu0 0.0
      %419 = vmatprep.subr.mxu0 0.0
      %420 = vmatpush1.msra.mxu0 0.0
      %421 = vmatprep.subr.mxu0 0.0
      %422 = vmatpush1.msra.mxu0 0.0
      %423 = vmatprep.subr.mxu0 0.0
      %424 = vmatpush1.msra.mxu0 0.0
      %425 = vmatprep.subr.mxu0 0.0
      %426 = vmatpush1.msra.mxu0 0.0
      %427 = vmatprep.subr.mxu0 0.0
      %428 = vmatpush1.msra.mxu0 0.0
      %429 = vmatprep.subr.mxu0 0.0
      %430 = vmatpush1.msra.mxu0 0.0
      %431 = vmatprep.subr.mxu0 0.0
      %432 = vmatpush1.msra.mxu0 0.0
      %433 = vmatprep.subr.mxu0 0.0
      %434 = vmatpush1.msra.mxu0 0.0
      %435 = vmatprep.subr.mxu0 0.0
      %436 = vmatpush1.msra.mxu0 0.0
      %437 = vmatprep.subr.mxu0 0.0
      %438 = vmatpush1.msra.mxu0 0.0
      %439 = vmatprep.subr.mxu0 0.0
      %440 = vmatpush1.msra.mxu0 0.0
      %441 = vmatprep.subr.mxu0 0.0
      %442 = vmatpush1.msra.mxu0 0.0
      %443 = vmatprep.subr.mxu0 0.0
      %444 = vmatpush1.msra.mxu0 0.0
      %445 = vmatprep.subr.mxu0 0.0
      %446 = vmatpush1.msra.mxu0 0.0
      %447 = vmatprep.subr.mxu0 0.0
      %448 = vmatpush1.msra.mxu0 0.0
      %449 = vmatprep.subr.mxu0 0.0
      %450 = vmatpush1.msra.mxu0 0.0
      %451 = vmatprep.subr.mxu0 0.0
      %452 = vmatpush1.msra.mxu0 0.0
      %453 = vmatprep.subr.mxu0 0.0
      %454 = vmatpush1.msra.mxu0 0.0
      %455 = vmatprep.subr.mxu0 0.0
      %456 = vmatpush1.msra.mxu0 0.0
      %457 = vmatprep.subr.mxu0 0.0
      %458 = vmatpush1.msra.mxu0 0.0
      %459 = vmatprep.subr.mxu0 0.0
      %460 = vmatpush1.msra.mxu0 0.0
      %461 = vmatprep.mubr.f32.mxu0 0.0
      %462 = vmatmul.mubr.f32.gmra.mrb[0].mxu0 %v383
      %v463 = vpop.f32.mrb[0].mxu0
      %v464 = vadd.f32 0.0, %v463
      %v465 = vpop.f32.mrb[0].mxu0
      %v466 = vadd.f32 0.0, %v465
      %467 = vdwg.mxu0
      %468 = vmatprep.subr.mxu0 %v364
      %469 = vmatpush1.msra.mxu0 %v363
      %470 = vmatprep.subr.mxu0 %v368
      %471 = vmatpush1.msra.mxu0 %v367
      %472 = vmatprep.subr.mxu0 %v372
      %473 = vmatpush1.msra.mxu0 %v371
      %474 = vmatprep.subr.mxu0 %v376
      %475 = vmatpush1.msra.mxu0 %v375
      %476 = vmatprep.subr.mxu0 %v395
      %477 = vmatpush1.msra.mxu0 %v392
      %478 = vmatprep.subr.mxu0 0.0
      %479 = vmatpush1.msra.mxu0 0.0
      %480 = vmatprep.subr.mxu0 0.0
      %481 = vmatpush1.msra.mxu0 0.0
      %482 = vmatprep.subr.mxu0 0.0
      %483 = vmatpush1.msra.mxu0 0.0
      %484 = vmatprep.subr.mxu0 0.0
      %485 = vmatpush1.msra.mxu0 0.0
      %486 = vmatprep.subr.mxu0 0.0
      %487 = vmatpush1.msra.mxu0 0.0
      %488 = vmatprep.subr.mxu0 0.0
      %489 = vmatpush1.msra.mxu0 0.0
      %490 = vmatprep.subr.mxu0 0.0
      %491 = vmatpush1.msra.mxu0 0.0
      %492 = vmatprep.subr.mxu0 0.0
      %493 = vmatpush1.msra.mxu0 0.0
      %494 = vmatprep.subr.mxu0 0.0
      %495 = vmatpush1.msra.mxu0 0.0
      %496 = vmatprep.subr.mxu0 0.0
      %497 = vmatpush1.msra.mxu0 0.0
      %498 = vmatprep.subr.mxu0 0.0
      %499 = vmatpush1.msra.mxu0 0.0
      %500 = vmatprep.subr.mxu0 0.0
      %501 = vmatpush1.msra.mxu0 0.0
      %502 = vmatprep.subr.mxu0 0.0
      %503 = vmatpush1.msra.mxu0 0.0
      %504 = vmatprep.subr.mxu0 0.0
      %505 = vmatpush1.msra.mxu0 0.0
      %506 = vmatprep.subr.mxu0 0.0
      %507 = vmatpush1.msra.mxu0 0.0
      %508 = vmatprep.subr.mxu0 0.0
      %509 = vmatpush1.msra.mxu0 0.0
      %510 = vmatprep.subr.mxu0 0.0
      %511 = vmatpush1.msra.mxu0 0.0
      %512 = vmatprep.subr.mxu0 0.0
      %513 = vmatpush1.msra.mxu0 0.0
      %514 = vmatprep.subr.mxu0 0.0
      %515 = vmatpush1.msra.mxu0 0.0
      %516 = vmatprep.subr.mxu0 0.0
      %517 = vmatpush1.msra.mxu0 0.0
      %518 = vmatprep.subr.mxu0 0.0
      %519 = vmatpush1.msra.mxu0 0.0
      %520 = vmatprep.subr.mxu0 0.0
      %521 = vmatpush1.msra.mxu0 0.0
      %522 = vmatprep.subr.mxu0 0.0
      %523 = vmatpush1.msra.mxu0 0.0
      %524 = vmatprep.subr.mxu0 0.0
      %525 = vmatpush1.msra.mxu0 0.0
      %526 = vmatprep.subr.mxu0 0.0
      %527 = vmatpush1.msra.mxu0 0.0
      %528 = vmatprep.subr.mxu0 0.0
      %529 = vmatpush1.msra.mxu0 0.0
      %530 = vmatprep.subr.mxu0 0.0
      %531 = vmatpush1.msra.mxu0 0.0
      %532 = vmatprep.mubr.f32.mxu0 0.0
      %533 = vmatmul.mubr.f32.gmra.mrb[0].mxu0 %v383
      %v534 = vpop.f32.mrb[0].mxu0
      %v535 = vadd.f32 0.0, %v534
      %v536 = vpop.f32.mrb[0].mxu0
      %v537 = vadd.f32 0.0, %v536
      %538 = vdwg.mxu0
      %v539 = vsel %vm324, %v464, 0.0
      %v540 = vsel %vm324, %v466, 0.0
      %v541 = vadd.f32 %v539, %v540
      %542 = vadd.xlane.f32.xlu0 %v541
      %v543 = vpop.xlane.xlu0 %542
      %v544 = vrcp.pop 256.0
      %v545 = vmul.f32 %v543, %v544
      %v546 = vsub.f32 %v464, %v545
      %v547 = vsub.f32 %v466, %v545
      %v548 = vmul.f32 %v546, %v546
      %v549 = vmul.f32 %v547, %v547
      %v550 = vsel %vm324, %v548, 0.0
      %v551 = vsel %vm324, %v549, 0.0
      %v552 = vadd.f32 %v550, %v551
      %553 = vadd.xlane.f32.xlu0 %v552
      %v554 = vpop.xlane.xlu0 %553
      %v555 = vmul.f32 %v554, %v544
      %v556 = vadd.f32 %v555, 1e-05
      %v557 = vrsqrt.pop %v556
      %v558 = vmul.f32 %v546, %v557
      %v559 = vmul.f32 %v547, %v557
      %v560 = vsel %vm324, %v535, 0.0
      %v561 = vsel %vm324, %v537, 0.0
      %v562 = vadd.f32 %v560, %v561
      %563 = vadd.xlane.f32.xlu0 %v562
      %v564 = vpop.xlane.xlu0 %563
      %v565 = vmul.f32 %v564, %v544
      %v566 = vsub.f32 %v535, %v565
      %v567 = vsub.f32 %v537, %v565
      %v568 = vmul.f32 %v566, %v566
      %v569 = vmul.f32 %v567, %v567
      %v570 = vsel %vm324, %v568, 0.0
      %v571 = vsel %vm324, %v569, 0.0
      %v572 = vadd.f32 %v570, %v571
      %573 = vadd.xlane.f32.xlu0 %v572
      %v574 = vpop.xlane.xlu0 %573
      %v575 = vmul.f32 %v574, %v544
      %v576 = vadd.f32 %v575, 1e-05
      %v577 = vrsqrt.pop %v576
      %v578 = vmul.f32 %v566, %v577
      %v579 = vmul.f32 %v567, %v577
      %vm580 = vcmp.ge.f32.partialorder %v558, 0.0
      %vm581 = vcmp.ge.f32.partialorder %v559, 0.0
      %vm582 = vcmp.ge.f32.partialorder %v578, 0.0
      %vm583 = vcmp.ge.f32.partialorder %v579, 0.0
      %v584 = vmul.f32 %v558, 0.2
      %v585 = vmul.f32 %v559, 0.2
      %v586 = vmul.f32 %v578, 0.2
      %v587 = vmul.f32 %v579, 0.2
      %v588 = vsel %vm580, %v558, %v584
      %v589 = vsel %vm581, %v559, %v585
      %v590 = vsel %vm582, %v578, %v586
      %v591 = vsel %vm583, %v579, %v587
      %v596 = vcombine.low %v588, %v589
      %v597 = vcombine.low %v590, %v591
      %v600 = vadd.f32 %v161, %v596
      %v601 = vadd.f32 %v162, %v597
      %602 = vst [vmem:[%s3] sm:$0xff] %v600
      %603 = vst [vmem:[%s3 + $0x8] sm:$0xff] %v601
      // Predicated region
      $region37: #{resnet_fo_forward.1} parent=31 // pred_check
        %p604 = pneg %p95
      $region38: #{resnet_fo_forward.1} parent=31 // pred_check_branch
        %606 = sbr.rel (%p604) target = $region40
      $region39: #{resnet_fo_forward.1} parent=31 // pred_region
        _
      $region40: #{resnet_fo_forward.1} parent=31 // pred_fallthru
        _
      // Predicated region
      $region41: #{resnet_fo_forward.1} parent=31 // pred_check
        %p607 = pneg %p95
      $region42: #{resnet_fo_forward.1} parent=31 // pred_check_branch
        %609 = sbr.rel (%p607) target = $region44
      $region43: #{resnet_fo_forward.1} parent=31 // pred_region
        _
      $region44: #{resnet_fo_forward.1} parent=31 // pred_fallthru
        _
    $region32: #{resnet_fo_forward.1} parent=5 // pred_fallthru
      _
    %p610 = scmp.le.s32.totalorder 2, %s9
    // Predicated region
    $region45: #{resnet_fo_forward.1} parent=5 // pred_check
      %p611 = pneg %p610
    $region46: #{resnet_fo_forward.1} parent=5 // pred_check_branch
      %613 = sbr.rel (%p611) target = $region48
    $region47: #{resnet_fo_forward.1} parent=5 // pred_region
      %s614 = ssub.s32 %s9, 2
    $region48: #{resnet_fo_forward.1} parent=5 // pred_fallthru
      _
  $region6: #{resnet_fo_forward.1} parent=0 // loop_footer
    %s13 = sadd.s32 1, %s9
  $region7: #{resnet_fo_forward.1} parent=0 // loop_footer_branch
    %8 = sbr.rel target = $region3
  $region8: #{resnet_fo_forward.1} parent=0 // loop_exit
    _

</llo_original>
